<compile_context>
chip_gen: v5e
topology: v5e:2x2
jax: 0.10.0
libtpu: 0.0.40
codegen_flags: <defaults>
</compile_context>

<pallas_src>
import jax
import jax.numpy as jnp
from jax.experimental import pallas as pl
from jax.experimental.pallas import tpu as pltpu

# ---- model / graph sizes (pool_sizes="1", num_pool_matrix=1, num_pool_final_matrix=0)
N = 16        # nodes in original graph
F_IN = 8      # input node features
HID = 32      # hidden dim of GCN layer 1
M = 8         # nodes after pooling (adj_pool_1)
D_OUT = 32    # embedding dim
G = 3         # anchor / positive / negative

NT = G * N    # 48 total nodes (block-diagonal batch of the 3 graphs)
MT = G * M    # 24 total pooled nodes

LANES = 128
OUT_ROWS = 8          # lane-dense packed output tile per triplet
OUT_COLS = LANES

# graph-slab row layout (everything starts at lane 0, sublane offsets multiple of 8)
ROW_A = 0                 # A_blk  (NT, NT)
ROW_H0 = ROW_A + NT       # H0     (NT, F_IN)
ROW_U = ROW_H0 + NT       # U_blk  (MT, NT)
ROW_AP = ROW_U + MT       # Ap_blk (MT, MT)
ROWS_G = ROW_AP + MT      # 144

# params-slab row layout
PROW_W1 = 0               # W1 (F_IN, HID)
PROW_B1 = 8               # b1 (1, HID)
PROW_W2 = 16              # W2 (HID, D_OUT)
PROW_B2 = 48              # b2 (1, D_OUT)
ROWS_P = 56


# ---------------------------------------------------------------------------
# Fused kernel: one triplet per grid step (3-graph GCN + both pairwise distances)
# ---------------------------------------------------------------------------
def triplet_gcn_kernel(g_ref, p_ref, out_ref):
    # static slab slices (views, zero cost)
    a_blk = g_ref[ROW_A:ROW_A + NT, 0:NT]            # (48, 48) block-diag adjacency
    h0 = g_ref[ROW_H0:ROW_H0 + NT, 0:F_IN]           # (48, 8)  stacked node features
    u_blk = g_ref[ROW_U:ROW_U + MT, 0:NT]            # (24, 48) block-diag pooling
    ap_blk = g_ref[ROW_AP:ROW_AP + MT, 0:MT]         # (24, 24) block-diag pooled adj

    w1 = p_ref[PROW_W1:PROW_W1 + F_IN, 0:HID]        # (8, 32)
    b1 = p_ref[PROW_B1:PROW_B1 + 1, 0:HID]           # (1, 32)
    w2 = p_ref[PROW_W2:PROW_W2 + HID, 0:D_OUT]       # (32, 32)
    b2 = p_ref[PROW_B2:PROW_B2 + 1, 0:D_OUT]         # (1, 32)

    # GCN layer 1 (all 3 graphs at once): H1 = relu(A_blk @ (H0 @ W1) + b1)
    xw1 = jnp.dot(h0, w1, preferred_element_type=jnp.float32)
    h1 = jnp.maximum(
        jnp.dot(a_blk, xw1, preferred_element_type=jnp.float32) + b1, 0.0)

    # eigen pooling: Hpool = U_blk @ H1
    hp = jnp.dot(u_blk, h1, preferred_element_type=jnp.float32)

    # GCN layer 2: H2 = relu(Ap_blk @ (Hpool @ W2) + b2)
    xw2 = jnp.dot(hp, w2, preferred_element_type=jnp.float32)
    h2 = jnp.maximum(
        jnp.dot(ap_blk, xw2, preferred_element_type=jnp.float32) + b2, 0.0)

    # per-graph readout as sublane sums (XLU) -- no readout matmul / extra input
    e_a = jnp.sum(h2[0 * M:1 * M, :], axis=0, keepdims=True)     # (1, D_OUT)
    e_p = jnp.sum(h2[1 * M:2 * M, :], axis=0, keepdims=True)
    e_n = jnp.sum(h2[2 * M:3 * M, :], axis=0, keepdims=True)
    embeds = jnp.concatenate([e_a, e_p, e_n], axis=0)            # (3, D_OUT)

    # F.pairwise_distance(x, y, 2): || x - y + 1e-6 ||_2, both distances at once
    eps = 1e-6
    diff = jnp.concatenate([e_a - e_p, e_a - e_n], axis=0) + eps  # (2, D_OUT)
    d = jnp.sqrt(jnp.sum(diff * diff, axis=-1, keepdims=True))    # (2, 1)

    # compose the full (8, 128) tile in vregs; single unmasked store
    emb_rows = jnp.concatenate(
        [embeds, jnp.zeros((G, OUT_COLS - D_OUT), jnp.float32)], axis=1)     # (3, 128)
    dist_rows = jnp.concatenate(
        [d, jnp.zeros((2, OUT_COLS - 1), jnp.float32)], axis=1)              # (2, 128)
    pad_rows = jnp.zeros((OUT_ROWS - G - 2, OUT_COLS), jnp.float32)          # (3, 128)
    out_ref[...] = jnp.concatenate([emb_rows, dist_rows, pad_rows], axis=0)  # (8, 128)


def triplet_gcn_call(graph_slabs, params_slab):
    """graph_slabs: (B, ROWS_G, 128) f32; params_slab: (ROWS_P, 128) f32.
    Returns packed (B, 8, 128): rows 0..2 = embeds, rows 3/4 col 0 = dist_p/dist_n."""
    B = graph_slabs.shape[0]
    flops_per_triplet = 2 * (NT * F_IN * HID + NT * NT * HID + MT * NT * HID
                             + MT * HID * D_OUT + MT * MT * D_OUT)
    cost = pl.CostEstimate(
        flops=B * flops_per_triplet,
        transcendentals=B * 2,
        bytes_accessed=(B * (ROWS_G + OUT_ROWS) * OUT_COLS + ROWS_P * OUT_COLS) * 4,
    )
    return pl.pallas_call(
        triplet_gcn_kernel,
        out_shape=jax.ShapeDtypeStruct((B, OUT_ROWS, OUT_COLS), jnp.float32),
        grid=(B,),
        in_specs=[
            pl.BlockSpec((None, ROWS_G, OUT_COLS), lambda b: (b, 0, 0)),  # per-triplet slab
            pl.BlockSpec((ROWS_P, OUT_COLS), lambda b: (0, 0)),           # shared params slab
        ],
        out_specs=pl.BlockSpec((None, OUT_ROWS, OUT_COLS), lambda b: (b, 0, 0)),
        compiler_params=pltpu.CompilerParams(
            dimension_semantics=("parallel",)),   # v7x: shard triplets across both TCs
        cost_estimate=cost,
    )(graph_slabs, params_slab)


# ---------------------------------------------------------------------------
# Slab packing (runs inside the same jit as the kernel call)
# ---------------------------------------------------------------------------
def _block_diag3(m0, m1, m2):
    r0, c0 = m0.shape
    r1, c1 = m1.shape
    r2, c2 = m2.shape
    row0 = jnp.concatenate([m0, jnp.zeros((r0, c1 + c2), m0.dtype)], axis=1)
    row1 = jnp.concatenate([jnp.zeros((r1, c0), m1.dtype), m1,
                            jnp.zeros((r1, c2), m1.dtype)], axis=1)
    row2 = jnp.concatenate([jnp.zeros((r2, c0 + c1), m2.dtype), m2], axis=1)
    return jnp.concatenate([row0, row1, row2], axis=0)


def _pad_lanes(x):
    return jnp.pad(x, ((0, 0), (0, OUT_COLS - x.shape[1])))


def _pack_one_triplet(adj3, feats3, pool3, adjp3):
    """adj3 (3,N,N), feats3 (3,N,F_IN), pool3 (3,M,N), adjp3 (3,M,M) -> (ROWS_G, 128)."""
    a_blk = _block_diag3(adj3[0], adj3[1], adj3[2])        # (48, 48)
    h0 = feats3.reshape(NT, F_IN)                          # (48, 8)
    u_blk = _block_diag3(pool3[0], pool3[1], pool3[2])     # (24, 48)
    ap_blk = _block_diag3(adjp3[0], adjp3[1], adjp3[2])    # (24, 24)
    return jnp.concatenate(
        [_pad_lanes(a_blk), _pad_lanes(h0), _pad_lanes(u_blk), _pad_lanes(ap_blk)],
        axis=0)                                            # (144, 128)


def _pack_params_slab(w1, b1, w2, b2):
    def blk(x, nrows):
        return jnp.pad(x, ((0, nrows - x.shape[0]), (0, OUT_COLS - x.shape[1])))
    return jnp.concatenate([blk(w1, 8), blk(b1, 8), blk(w2, 32), blk(b2, 8)],
                           axis=0)                         # (56, 128)


@jax.jit
def _tripletnet_impl(adj, feats, pool, adjp, w1, b1, w2, b2):
    """adj (B,3,N,N), feats (B,3,N,F_IN), pool (B,3,M,N), adjp (B,3,M,M)."""
    graph_slabs = jax.vmap(_pack_one_triplet)(adj, feats, pool, adjp)  # (B, 144, 128)
    params_slab = _pack_params_slab(w1, b1, w2, b2)                    # (56, 128)
    packed = triplet_gcn_call(graph_slabs, params_slab)                # (B, 8, 128)
    embeds = packed[:, 0:G, 0:D_OUT]                                   # (B, 3, D_OUT)
    dists = packed[:, G:G + 2, 0]                                      # (B, 2)
    return dists, embeds


# ---------------------------------------------------------------------------
# tripletnet.forward equivalents
# ---------------------------------------------------------------------------
def tripletnet_forward_batched(triplets, params):
    """triplets: list of (graph_a, graph_p, graph_n) dicts. One kernel launch for all.
    Returns (dists (B,2), embeds (B,3,D_OUT))."""
    adj = jnp.stack([jnp.stack([g["adj"] for g in t]) for t in triplets])
    feats = jnp.stack([jnp.stack([g["feats"] for g in t]) for t in triplets])
    pool = jnp.stack([jnp.stack([g["pool_adj_0_0"] for g in t]) for t in triplets])
    adjp = jnp.stack([jnp.stack([g["adj_pool_1"] for g in t]) for t in triplets])
    return _tripletnet_impl(adj, feats, pool, adjp,
                            params["w1"], params["b1"], params["w2"], params["b2"])


def tripletnet_forward(graph_a, graph_p, graph_n, params):
    """Module-equivalent single-triplet API: returns
    (dist_p, dist_n, embed_a, embed_p, embed_n) like the PyTorch forward."""
    dists, embeds = tripletnet_forward_batched([(graph_a, graph_p, graph_n)], params)
    dist_p = dists[0, 0:1]            # (1,)
    dist_n = dists[0, 1:2]            # (1,)
    embed_a = embeds[0, 0:1, :]       # (1, D_OUT) -- PyTorch model batch dim of 1
    embed_p = embeds[0, 1:2, :]
    embed_n = embeds[0, 2:3, :]
    # TODO(synk): num_pool_final_matrix > 0 branch (final pooling matrices) not
    # exercised; args chosen as pool_sizes="1", num_pool_matrix=1, num_pool_final_matrix=0.
    return dist_p, dist_n, embed_a, embed_p, embed_n


def _make_graph(key):
    k1, k2, k3, k4 = jax.random.split(key, 4)
    adj_raw = jax.random.uniform(k1, (N, N), jnp.float32)
    adj = ((adj_raw + adj_raw.T) > 1.0).astype(jnp.float32) + jnp.eye(N, dtype=jnp.float32)
    feats = jax.random.normal(k2, (N, F_IN), jnp.float32)
    pool = jax.random.normal(k3, (M, N), jnp.float32) * 0.1
    adjp_raw = jax.random.uniform(k4, (M, M), jnp.float32)
    adj_pool = ((adjp_raw + adjp_raw.T) > 1.0).astype(jnp.float32) + jnp.eye(M, dtype=jnp.float32)
    return {"adj": adj, "feats": feats, "pool_adj_0_0": pool, "adj_pool_1": adj_pool}


if __name__ == "__main__":
    key = jax.random.PRNGKey(0)
    kg, kw1, kw2 = jax.random.split(key, 3)

    B = 2  # triplets per kernel launch (grid=(B,))
    gkeys = jax.random.split(kg, B * G)
    graphs = [_make_graph(k) for k in gkeys]
    triplets = [tuple(graphs[b * G:(b + 1) * G]) for b in range(B)]

    params = {
        "w1": jax.random.normal(kw1, (F_IN, HID), jnp.float32) * 0.1,
        "b1": jnp.full((1, HID), 0.05, jnp.float32),
        "w2": jax.random.normal(kw2, (HID, D_OUT), jnp.float32) * 0.1,
        "b2": jnp.full((1, D_OUT), -0.02, jnp.float32),
    }

    # batched path: one pallas_call for all B triplets
    dists, embeds = tripletnet_forward_batched(triplets, params)
    jax.block_until_ready((dists, embeds))

    # module-equivalent single-triplet path (B=1)
    dist_p, dist_n, embed_a, embed_p, embed_n = tripletnet_forward(*triplets[0], params)
    jax.block_until_ready((dist_p, dist_n, embed_a, embed_p, embed_n))

    # plain-JAX reference
    def ref_embed(g):
        h1 = jnp.maximum(g["adj"] @ (g["feats"] @ params["w1"]) + params["b1"], 0.0)
        hp = g["pool_adj_0_0"] @ h1
        h2 = jnp.maximum(g["adj_pool_1"] @ (hp @ params["w2"]) + params["b2"], 0.0)
        return jnp.sum(h2, axis=0, keepdims=True)

    for b, (ga, gp, gn) in enumerate(triplets):
        ra, rp, rn = ref_embed(ga), ref_embed(gp), ref_embed(gn)
        rdp = jnp.sqrt(jnp.sum((ra - rp + 1e-6) ** 2, axis=-1))[0]
        rdn = jnp.sqrt(jnp.sum((ra - rn + 1e-6) ** 2, axis=-1))[0]
        assert jnp.allclose(embeds[b, 0], ra[0], rtol=1e-5, atol=1e-5)
        assert jnp.allclose(embeds[b, 1], rp[0], rtol=1e-5, atol=1e-5)
        assert jnp.allclose(embeds[b, 2], rn[0], rtol=1e-5, atol=1e-5)
        assert jnp.allclose(dists[b, 0], rdp, rtol=1e-5, atol=1e-5)
        assert jnp.allclose(dists[b, 1], rdn, rtol=1e-5, atol=1e-5)

    ra = ref_embed(triplets[0][0])
    rp = ref_embed(triplets[0][1])
    rn = ref_embed(triplets[0][2])
    rdp = jnp.sqrt(jnp.sum((ra - rp + 1e-6) ** 2, axis=-1))
    rdn = jnp.sqrt(jnp.sum((ra - rn + 1e-6) ** 2, axis=-1))
    assert jnp.allclose(embed_a, ra, rtol=1e-5, atol=1e-5)
    assert jnp.allclose(embed_p, rp, rtol=1e-5, atol=1e-5)
    assert jnp.allclose(embed_n, rn, rtol=1e-5, atol=1e-5)
    assert jnp.allclose(dist_p, rdp, rtol=1e-5, atol=1e-5)
    assert jnp.allclose(dist_n, rdn, rtol=1e-5, atol=1e-5)

    print("KERNEL_OK")
</pallas_src>

<mosaic_0001>
module attributes {stable_mosaic.version = 11 : i64} {
  func.func @triplet_gcn_kernel(%arg0: i32, %arg1: memref<1x144x128xf32, #tpu.memory_space<vmem>>, %arg2: memref<56x128xf32, #tpu.memory_space<vmem>>, %arg3: memref<1x8x128xf32, #tpu.memory_space<vmem>>) attributes {dimension_semantics = [#tpu.dimension_semantics<parallel>], iteration_bounds = array<i64: 2>, scalar_prefetch = 0 : i64, scratch_operands = 0 : i64, tpu.core_type = #tpu.core_type<tc>, window_params = [{transform_indices = @transform_0, window_bounds = array<i64: 1, 144, 128>}, {pipeline_mode = #tpu.pipeline_mode<synchronous>, transform_indices = @transform_1, window_bounds = array<i64: 56, 128>}, {transform_indices = @transform_2, window_bounds = array<i64: 1, 8, 128>}]} {
    %c0 = arith.constant 0 : index
    %c0_0 = arith.constant 0 : index
    %c0_1 = arith.constant 0 : index
    %0 = vector.load %arg1[%c0, %c0_0, %c0_1] : memref<1x144x128xf32, #tpu.memory_space<vmem>>, vector<1x48x48xf32>
    %1 = vector.shape_cast %0 : vector<1x48x48xf32> to vector<48x48xf32>
    %c0_2 = arith.constant 0 : index
    %c48 = arith.constant 48 : index
    %c0_3 = arith.constant 0 : index
    %2 = vector.load %arg1[%c0_2, %c48, %c0_3] : memref<1x144x128xf32, #tpu.memory_space<vmem>>, vector<1x48x8xf32>
    %3 = vector.shape_cast %2 : vector<1x48x8xf32> to vector<48x8xf32>
    %c0_4 = arith.constant 0 : index
    %c96 = arith.constant 96 : index
    %c0_5 = arith.constant 0 : index
    %4 = vector.load %arg1[%c0_4, %c96, %c0_5] : memref<1x144x128xf32, #tpu.memory_space<vmem>>, vector<1x24x48xf32>
    %5 = vector.shape_cast %4 : vector<1x24x48xf32> to vector<24x48xf32>
    %c0_6 = arith.constant 0 : index
    %c120 = arith.constant 120 : index
    %c0_7 = arith.constant 0 : index
    %6 = vector.load %arg1[%c0_6, %c120, %c0_7] : memref<1x144x128xf32, #tpu.memory_space<vmem>>, vector<1x24x24xf32>
    %7 = vector.shape_cast %6 : vector<1x24x24xf32> to vector<24x24xf32>
    %c0_8 = arith.constant 0 : index
    %c0_9 = arith.constant 0 : index
    %8 = vector.load %arg2[%c0_8, %c0_9] : memref<56x128xf32, #tpu.memory_space<vmem>>, vector<8x32xf32>
    %c8 = arith.constant 8 : index
    %c0_10 = arith.constant 0 : index
    %9 = vector.load %arg2[%c8, %c0_10] : memref<56x128xf32, #tpu.memory_space<vmem>>, vector<1x32xf32>
    %c16 = arith.constant 16 : index
    %c0_11 = arith.constant 0 : index
    %10 = vector.load %arg2[%c16, %c0_11] : memref<56x128xf32, #tpu.memory_space<vmem>>, vector<32x32xf32>
    %c48_12 = arith.constant 48 : index
    %c0_13 = arith.constant 0 : index
    %11 = vector.load %arg2[%c48_12, %c0_13] : memref<56x128xf32, #tpu.memory_space<vmem>>, vector<1x32xf32>
    %cst = arith.constant dense<0.000000e+00> : vector<48x32xf32>
    %12 = tpu.matmul %3, %8, %cst {dimension_numbers = #tpu.dot_dimension_numbers<[1], [0], [0], [1], [0, 0, 1, 1], [], []>} : vector<48x8xf32>, vector<8x32xf32>, vector<48x32xf32> -> vector<48x32xf32>
    %cst_14 = arith.constant dense<0.000000e+00> : vector<48x32xf32>
    %13 = tpu.matmul %1, %12, %cst_14 {dimension_numbers = #tpu.dot_dimension_numbers<[1], [0], [0], [1], [0, 0, 1, 1], [], []>} : vector<48x48xf32>, vector<48x32xf32>, vector<48x32xf32> -> vector<48x32xf32>
    %14 = vector.broadcast %9 : vector<1x32xf32> to vector<48x32xf32>
    %15 = arith.addf %13, %14 : vector<48x32xf32>
    %cst_15 = arith.constant 0.000000e+00 : f32
    %16 = vector.broadcast %cst_15 : f32 to vector<48x32xf32>
    %17 = arith.maximumf %15, %16 : vector<48x32xf32>
    %cst_16 = arith.constant dense<0.000000e+00> : vector<24x32xf32>
    %18 = tpu.matmul %5, %17, %cst_16 {dimension_numbers = #tpu.dot_dimension_numbers<[1], [0], [0], [1], [0, 0, 1, 1], [], []>} : vector<24x48xf32>, vector<48x32xf32>, vector<24x32xf32> -> vector<24x32xf32>
    %cst_17 = arith.constant dense<0.000000e+00> : vector<24x32xf32>
    %19 = tpu.matmul %18, %10, %cst_17 {dimension_numbers = #tpu.dot_dimension_numbers<[1], [0], [0], [1], [0, 0, 1, 1], [], []>} : vector<24x32xf32>, vector<32x32xf32>, vector<24x32xf32> -> vector<24x32xf32>
    %cst_18 = arith.constant dense<0.000000e+00> : vector<24x32xf32>
    %20 = tpu.matmul %7, %19, %cst_18 {dimension_numbers = #tpu.dot_dimension_numbers<[1], [0], [0], [1], [0, 0, 1, 1], [], []>} : vector<24x24xf32>, vector<24x32xf32>, vector<24x32xf32> -> vector<24x32xf32>
    %21 = vector.broadcast %11 : vector<1x32xf32> to vector<24x32xf32>
    %22 = arith.addf %20, %21 : vector<24x32xf32>
    %cst_19 = arith.constant 0.000000e+00 : f32
    %23 = vector.broadcast %cst_19 : f32 to vector<24x32xf32>
    %24 = arith.maximumf %22, %23 : vector<24x32xf32>
    %25 = vector.extract_strided_slice %24 {offsets = [0, 0], sizes = [8, 32], strides = [1, 1]} : vector<24x32xf32> to vector<8x32xf32>
    %cst_20 = arith.constant dense<0.000000e+00> : vector<32xf32>
    %26 = vector.multi_reduction <add>, %25, %cst_20 [0] : vector<8x32xf32> to vector<32xf32>
    %27 = vector.shape_cast %26 : vector<32xf32> to vector<1x32xf32>
    %28 = vector.extract_strided_slice %24 {offsets = [8, 0], sizes = [8, 32], strides = [1, 1]} : vector<24x32xf32> to vector<8x32xf32>
    %cst_21 = arith.constant dense<0.000000e+00> : vector<32xf32>
    %29 = vector.multi_reduction <add>, %28, %cst_21 [0] : vector<8x32xf32> to vector<32xf32>
    %30 = vector.shape_cast %29 : vector<32xf32> to vector<1x32xf32>
    %31 = vector.extract_strided_slice %24 {offsets = [16, 0], sizes = [8, 32], strides = [1, 1]} : vector<24x32xf32> to vector<8x32xf32>
    %cst_22 = arith.constant dense<0.000000e+00> : vector<32xf32>
    %32 = vector.multi_reduction <add>, %31, %cst_22 [0] : vector<8x32xf32> to vector<32xf32>
    %33 = vector.shape_cast %32 : vector<32xf32> to vector<1x32xf32>
    %34 = tpu.concatenate %27, %30, %33 in 0 : vector<1x32xf32>, vector<1x32xf32>, vector<1x32xf32> -> vector<3x32xf32>
    %35 = arith.subf %27, %30 : vector<1x32xf32>
    %36 = arith.subf %27, %33 : vector<1x32xf32>
    %37 = tpu.concatenate %35, %36 in 0 : vector<1x32xf32>, vector<1x32xf32> -> vector<2x32xf32>
    %cst_23 = arith.constant 9.99999997E-7 : f32
    %38 = vector.broadcast %cst_23 : f32 to vector<2x32xf32>
    %39 = arith.addf %37, %38 : vector<2x32xf32>
    %40 = arith.mulf %39, %39 : vector<2x32xf32>
    %cst_24 = arith.constant dense<0.000000e+00> : vector<2xf32>
    %41 = vector.multi_reduction <add>, %40, %cst_24 [1] : vector<2x32xf32> to vector<2xf32>
    %42 = vector.shape_cast %41 : vector<2xf32> to vector<2x1xf32>
    %43 = math.sqrt %42 : vector<2x1xf32>
    %cst_25 = arith.constant 0.000000e+00 : f32
    %44 = vector.broadcast %cst_25 : f32 to vector<3x96xf32>
    %45 = tpu.concatenate %34, %44 in 1 : vector<3x32xf32>, vector<3x96xf32> -> vector<3x128xf32>
    %cst_26 = arith.constant 0.000000e+00 : f32
    %46 = vector.broadcast %cst_26 : f32 to vector<2x127xf32>
    %47 = tpu.concatenate %43, %46 in 1 : vector<2x1xf32>, vector<2x127xf32> -> vector<2x128xf32>
    %cst_27 = arith.constant 0.000000e+00 : f32
    %48 = vector.broadcast %cst_27 : f32 to vector<3x128xf32>
    %49 = tpu.concatenate %45, %47, %48 in 0 : vector<3x128xf32>, vector<2x128xf32>, vector<3x128xf32> -> vector<8x128xf32>
    %c0_28 = arith.constant 0 : index
    %c0_29 = arith.constant 0 : index
    %c0_30 = arith.constant 0 : index
    %50 = vector.load %arg3[%c0_28, %c0_29, %c0_30] : memref<1x8x128xf32, #tpu.memory_space<vmem>>, vector<1x8x128xf32>
    %51 = vector.shape_cast %50 : vector<1x8x128xf32> to vector<8x128xf32>
    %52 = vector.shape_cast %49 : vector<8x128xf32> to vector<1x8x128xf32>
    tpu.vector_store %arg3[%c0_28, %c0_29, %c0_30], %52 {strides = array<i32>} : memref<1x8x128xf32, #tpu.memory_space<vmem>>, vector<1x8x128xf32>,
    return
  }
  func.func @transform_0(%arg0: i32) -> (i32, i32, i32) {
    %c0_i32 = arith.constant 0 : i32
    %c0_i32_0 = arith.constant 0 : i32
    %c0_i32_1 = arith.constant 0 : i32
    return %arg0, %c0_i32, %c0_i32_0 : i32, i32, i32
  }
  func.func @transform_1(%arg0: i32) -> (i32, i32) {
    %c0_i32 = arith.constant 0 : i32
    %c0_i32_0 = arith.constant 0 : i32
    %c0_i32_1 = arith.constant 0 : i32
    return %c0_i32, %c0_i32_0 : i32, i32
  }
  func.func @transform_2(%arg0: i32) -> (i32, i32, i32) {
    %c0_i32 = arith.constant 0 : i32
    %c0_i32_0 = arith.constant 0 : i32
    %c0_i32_1 = arith.constant 0 : i32
    return %arg0, %c0_i32, %c0_i32_0 : i32, i32, i32
  }
}

</mosaic_0001>

<llo_original>
// kernel: _tripletnet_impl.1
$region0: #{_tripletnet_impl.1}
  #allocation0 [shape = 'u32[]', space=smem, size = 0x4, offset = 0x4, fixed_abs, tag = 'smem constant byte address 0x4 - core index']
  #allocation1 [shape = 'u32[72,128]{1,0:T(1,128)}', space=vmem, size = 0x9000, scoped, tag = 'internal scratch']
  %s0 = inlined_call_operand.vmem [shape: f32[2,144,128], index: 0, kind: input, shape index: {}]
  %s1 = inlined_call_operand.vmem [shape: f32[56,128], index: 1, kind: input, shape index: {}]
  %s2 = inlined_call_operand.vmem [shape: f32[2,8,128], index: 2, kind: output, shape index: {}]
  %s3 = sld [smem:[#allocation0]]
  $region41: #{_tripletnet_impl.1} parent=0
    _
  %s5 = ssub.s32 1, %s3
  %s6 = scalar_select 0, %s5, %s3
  loop: start=0, step=1, limit=4
  $region2: #{_tripletnet_impl.1} parent=0 // loop_pre_header
    _
  $region3: #{_tripletnet_impl.1} parent=0 // loop_header
    %s8 = sphi 0, %s12
    %p9 = scmp.ge.s32.totalorder %s8, 4
    %s18 = sphi 0, %s20
    %s21 = sphi 0, %s18
    %s22 = sphi 0, %s21
    %s38 = sphi 0, %s22
    %s42 = sphi 0, %s42
    %s44 = sphi 0, %s42
    %s45 = sphi 0, %s44
    %s59 = sphi 0, %s45
    %s65 = sphi 0, %s67
    %s68 = sphi 0, %s65
    %s69 = sphi 0, %s68
    %s85 = sphi 0, %s69
  $region4: #{_tripletnet_impl.1} parent=0 // loop_header_branch
    %11 = sbr.rel (%p9) target = $region8
  $region5: #{_tripletnet_impl.1} parent=0 // loop_body
    %s13 = ssub.s32 %s8, 1
    %s14 = ssub.s32 %s8, 2
    %s15 = sadd.s32 %s8, 1
    %s16 = ssub.s32 %s8, %s15
    %p17 = scmp.eq.s32.totalorder %s16, 0
    %s19 = sadd.s32 %s18, 1
    %s20 = scalar_select %p17, %s18, %s19
    %p23 = pneg %p17
    %p24 = scmp.eq.s32.totalorder %s8, 1
    %p25 = por %p23, %p24
    %p26 = scmp.ne.s32.totalorder %s18, %s21
    %p27 = scmp.eq.s32.totalorder %s8, 0
    %p28 = por %p26, %p27
    %p29 = scmp.ne.s32.totalorder %s18, %s21
    %p30 = scmp.eq.s32.totalorder %s13, 1
    %p31 = por %p29, %p30
    %p32 = scmp.ne.s32.totalorder %s21, %s22
    %p33 = scmp.eq.s32.totalorder %s13, 0
    %p34 = por %p32, %p33
    %p35 = scmp.ne.s32.totalorder %s21, %s22
    %p36 = scmp.eq.s32.totalorder %s14, 1
    %p37 = por %p35, %p36
    %p39 = scmp.ne.s32.totalorder %s22, %s38
    %p40 = scmp.eq.s32.totalorder %s14, 0
    %p41 = por %p39, %p40
    %s43 = sadd.s32 %s42, 1
    %p46 = scmp.eq.s32.totalorder %s8, 1
    %p47 = scmp.ne.s32.totalorder %s42, %s44
    %p48 = scmp.eq.s32.totalorder %s8, 0
    %p49 = por %p47, %p48
    %p50 = scmp.ne.s32.totalorder %s42, %s44
    %p51 = scmp.eq.s32.totalorder %s13, 1
    %p52 = por %p50, %p51
    %p53 = scmp.ne.s32.totalorder %s44, %s45
    %p54 = scmp.eq.s32.totalorder %s13, 0
    %p55 = por %p53, %p54
    %p56 = scmp.ne.s32.totalorder %s44, %s45
    %p57 = scmp.eq.s32.totalorder %s14, 1
    %p58 = por %p56, %p57
    %p60 = scmp.ne.s32.totalorder %s45, %s59
    %p61 = scmp.eq.s32.totalorder %s14, 0
    %p62 = por %p60, %p61
    %s63 = ssub.s32 %s8, %s15
    %p64 = scmp.eq.s32.totalorder %s63, 0
    %s66 = sadd.s32 %s65, 1
    %s67 = scalar_select %p64, %s65, %s66
    %p70 = pneg %p64
    %p71 = scmp.eq.s32.totalorder %s8, 1
    %p72 = por %p70, %p71
    %p73 = scmp.ne.s32.totalorder %s65, %s68
    %p74 = scmp.eq.s32.totalorder %s8, 0
    %p75 = por %p73, %p74
    %p76 = scmp.ne.s32.totalorder %s65, %s68
    %p77 = scmp.eq.s32.totalorder %s13, 1
    %p78 = por %p76, %p77
    %p79 = scmp.ne.s32.totalorder %s68, %s69
    %p80 = scmp.eq.s32.totalorder %s13, 0
    %p81 = por %p79, %p80
    %p82 = scmp.ne.s32.totalorder %s68, %s69
    %p83 = scmp.eq.s32.totalorder %s14, 1
    %p84 = por %p82, %p83
    %p86 = scmp.ne.s32.totalorder %s69, %s85
    %p87 = scmp.eq.s32.totalorder %s14, 0
    %p88 = por %p86, %p87
    %p89 = scmp.le.s32.totalorder 1, %s8
    %p90 = scmp.lt.s32.totalorder %s8, 3
    %p91 = pnand %p89, %p90
    %p92 = pneg %p91
    // Predicated region
    $region9: #{_tripletnet_impl.1} parent=5 // pred_check
      _
    $region10: #{_tripletnet_impl.1} parent=5 // pred_check_branch
      %94 = sbr.rel (%p91) target = $region12
    $region11: #{_tripletnet_impl.1} parent=5 // pred_region
      %s95 = ssub.s32 %s8, 1
      // Predicated region
      $region13: #{_tripletnet_impl.1} parent=11 // pred_check
        %p96 = pneg %p55
      $region14: #{_tripletnet_impl.1} parent=11 // pred_check_branch
        %98 = sbr.rel (%p96) target = $region16
      $region15: #{_tripletnet_impl.1} parent=11 // pred_region
        _
      $region16: #{_tripletnet_impl.1} parent=11 // pred_fallthru
        _
    $region12: #{_tripletnet_impl.1} parent=5 // pred_fallthru
      _
    %p99 = scmp.lt.s32.totalorder %s8, 2
    // Predicated region
    $region17: #{_tripletnet_impl.1} parent=5 // pred_check
      %p100 = pneg %p99
    $region18: #{_tripletnet_impl.1} parent=5 // pred_check_branch
      %102 = sbr.rel (%p100) target = $region20
    $region19: #{_tripletnet_impl.1} parent=5 // pred_region
      // Predicated region
      $region21: #{_tripletnet_impl.1} parent=19 // pred_check
        %p103 = pneg %p28
      $region22: #{_tripletnet_impl.1} parent=19 // pred_check_branch
        %105 = sbr.rel (%p103) target = $region24
      $region23: #{_tripletnet_impl.1} parent=19 // pred_region
        %p106 = scmp.lt.s32.totalorder %s8, 1
        %s107 = scalar_select %p106, %s8, 1
        %s108 = smul.addr %s107, 18
        %s109 = smul.addr %s108, 8
        %s110 = scalar_lea.vmem %s0, %s109
      $region24: #{_tripletnet_impl.1} parent=19 // pred_fallthru
        _
    $region20: #{_tripletnet_impl.1} parent=5 // pred_fallthru
      _
    %p111 = scmp.le.s32.totalorder 1, %s8
    %p112 = scmp.lt.s32.totalorder %s8, 3
    %p113 = pnand %p111, %p112
    %p114 = pneg %p113
    // Predicated region
    $region25: #{_tripletnet_impl.1} parent=5 // pred_check
      _
    $region26: #{_tripletnet_impl.1} parent=5 // pred_check_branch
      %116 = sbr.rel (%p113) target = $region28
    $region27: #{_tripletnet_impl.1} parent=5 // pred_region
      %s117 = ssub.s32 %s8, 1
      %p118 = scmp.lt.s32.totalorder %s13, 1
      %s119 = scalar_select %p118, %s13, 1
      %s120 = smul.addr %s119, 18
      %s121 = smul.addr %s120, 8
      %s122 = scalar_lea.vmem %s0, %s121
      %p123 = pneg %p34
      %p124 = pneg %p31
      %p125 = pneg %p55
      %p126 = pneg %p52
      %p127 = pneg %p81
      %p128 = pneg %p78
      %p129 = scmp.lt.s32.totalorder %s13, 1
      %s130 = scalar_select %p129, %s13, 1
      %s131 = smul.addr %s130, 8
      %s132 = scalar_lea.vmem %s2, %s131
      %p133 = scmp.lt.s32.totalorder %s13, 1
      %s134 = scalar_select %p133, %s13, 1
      %s135 = smul.addr %s134, 18
      %s136 = smul.addr %s135, 8
      %s137 = scalar_lea.vmem %s0, %s136
      %p138 = scmp.lt.s32.totalorder %s13, 1
      %s139 = scalar_select %p138, %s13, 1
      %s140 = smul.addr %s139, 8
      %s141 = scalar_lea.vmem %s2, %s140
      %v142 = vld [vmem:[%s137] sm:$0xff]
      %v143 = vld [vmem:[%s137 + $0x8] sm:$0xff]
      %v144 = vld [vmem:[%s137 + $0x10] sm:$0xff]
      %v145 = vld [vmem:[%s137 + $0x18] sm:$0xff]
      %v146 = vld [vmem:[%s137 + $0x20] sm:$0xff]
      %v147 = vld [vmem:[%s137 + $0x28] sm:$0xff]
      %v148 = vld [vmem:[%s137 + $0x30] sm:$0xff]
      %v149 = vld [vmem:[%s137 + $0x38] sm:$0xff]
      %v150 = vld [vmem:[%s137 + $0x40] sm:$0xff]
      %v151 = vld [vmem:[%s137 + $0x48] sm:$0xff]
      %v152 = vld [vmem:[%s137 + $0x50] sm:$0xff]
      %v153 = vld [vmem:[%s137 + $0x58] sm:$0xff]
      %v154 = vld [vmem:[%s137 + $0x60] sm:$0xff]
      %v155 = vld [vmem:[%s137 + $0x68] sm:$0xff]
      %v156 = vld [vmem:[%s137 + $0x70] sm:$0xff]
      %v157 = vld [vmem:[%s137 + $0x78] sm:$0xff]
      %v158 = vld [vmem:[%s137 + $0x80] sm:$0xff]
      %v159 = vld [vmem:[%s137 + $0x88] sm:$0xff]
      %v160 = vld [vmem:[%s1] sm:$0xff]
      %v161 = vld [vmem:[%s1 + $0x8] sm:$0x1]
      %v162 = vld [vmem:[%s1 + $0x10] sm:$0xff]
      %v163 = vld [vmem:[%s1 + $0x18] sm:$0xff]
      %v164 = vld [vmem:[%s1 + $0x20] sm:$0xff]
      %v165 = vld [vmem:[%s1 + $0x28] sm:$0xff]
      %v166 = vld [vmem:[%s1 + $0x30] sm:$0x1]
      %vm167 = vcmask 64512
      %v169 = vsel %vm167, %v148, 0
      %v172 = vsel %vm167, %v149, 0
      %v175 = vsel %vm167, %v150, 0
      %v178 = vsel %vm167, %v151, 0
      %v181 = vsel %vm167, %v152, 0
      %v184 = vsel %vm167, %v153, 0
      %186 = vmatpush.msra.mxu0 0.0
      %187 = vmatpush.msra.mxu0 0.0
      %188 = vmatpush.msra.mxu0 0.0
      %189 = vmatpush.msra.mxu0 0.0
      %190 = vmatpush.msra.mxu0 0.0
      %191 = vmatpush.msra.mxu0 0.0
      %192 = vmatpush.msra.mxu0 0.0
      %193 = vmatpush.msra.mxu0 0.0
      %194 = vmatpush.msra.mxu0 0.0
      %195 = vmatpush.msra.mxu0 0.0
      %196 = vmatpush.msra.mxu0 0.0
      %197 = vmatpush.msra.mxu0 0.0
      %198 = vmatpush.msra.mxu0 0.0
      %199 = vmatpush.msra.mxu0 0.0
      %200 = vmatpush.msra.mxu0 0.0
      %201 = vmatpush.msra.mxu0 %v160
      %202 = vmatmul.f32.gmra.mxu0 %v169
      %v203 = vpop.f32.mrf.mxu0
      %v204 = vadd.f32 0.0, %v203
      %205 = vmatmul.f32.gmra.mxu0 %v172
      %v206 = vpop.f32.mrf.mxu0
      %v207 = vadd.f32 0.0, %v206
      %208 = vmatmul.f32.gmra.mxu0 %v175
      %v209 = vpop.f32.mrf.mxu0
      %v210 = vadd.f32 0.0, %v209
      %211 = vmatmul.f32.gmra.mxu0 %v178
      %v212 = vpop.f32.mrf.mxu0
      %v213 = vadd.f32 0.0, %v212
      %214 = vmatmul.f32.gmra.mxu0 %v181
      %v215 = vpop.f32.mrf.mxu0
      %v216 = vadd.f32 0.0, %v215
      %217 = vmatmul.f32.gmra.mxu0 %v184
      %v218 = vpop.f32.mrf.mxu0
      %v219 = vadd.f32 0.0, %v218
      %220 = vdwg.mxu0
      %v221 = vperm.slane %v161, 0
      %vm222 = vcmask 392192
      %v224 = vsel %vm222, %v142, 0
      %v227 = vsel %vm222, %v143, 0
      %v230 = vsel %vm222, %v144, 0
      %v233 = vsel %vm222, %v145, 0
      %v236 = vsel %vm222, %v146, 0
      %v239 = vsel %vm222, %v147, 0
      %241 = vmatpush.msra.mxu0 0.0
      %242 = vmatpush.msra.mxu0 0.0
      %243 = vmatpush.msra.mxu0 0.0
      %244 = vmatpush.msra.mxu0 0.0
      %245 = vmatpush.msra.mxu0 0.0
      %246 = vmatpush.msra.mxu0 0.0
      %247 = vmatpush.msra.mxu0 0.0
      %248 = vmatpush.msra.mxu0 0.0
      %249 = vmatpush.msra.mxu0 0.0
      %250 = vmatpush.msra.mxu0 0.0
      %251 = vmatpush.msra.mxu0 %v219
      %252 = vmatpush.msra.mxu0 %v216
      %253 = vmatpush.msra.mxu0 %v213
      %254 = vmatpush.msra.mxu0 %v210
      %255 = vmatpush.msra.mxu0 %v207
      %256 = vmatpush.msra.mxu0 %v204
      %257 = vmatmul.f32.gmra.mxu0 %v224
      %v258 = vpop.f32.mrf.mxu0
      %v259 = vadd.f32 %v221, %v258
      %260 = vmatmul.f32.gmra.mxu0 %v227
      %v261 = vpop.f32.mrf.mxu0
      %v262 = vadd.f32 %v221, %v261
      %263 = vmatmul.f32.gmra.mxu0 %v230
      %v264 = vpop.f32.mrf.mxu0
      %v265 = vadd.f32 %v221, %v264
      %266 = vmatmul.f32.gmra.mxu0 %v233
      %v267 = vpop.f32.mrf.mxu0
      %v268 = vadd.f32 %v221, %v267
      %269 = vmatmul.f32.gmra.mxu0 %v236
      %v270 = vpop.f32.mrf.mxu0
      %v271 = vadd.f32 %v221, %v270
      %272 = vmatmul.f32.gmra.mxu0 %v239
      %v273 = vpop.f32.mrf.mxu0
      %v274 = vadd.f32 %v221, %v273
      %275 = vdwg.mxu0
      %v276 = vmax.f32 %v259, 0.0
      %v277 = vmax.f32 %v262, 0.0
      %v278 = vmax.f32 %v265, 0.0
      %v279 = vmax.f32 %v268, 0.0
      %v280 = vmax.f32 %v271, 0.0
      %v281 = vmax.f32 %v274, 0.0
      %v283 = vsel %vm222, %v154, 0
      %v286 = vsel %vm222, %v155, 0
      %v289 = vsel %vm222, %v156, 0
      %291 = vmatpush.msra.mxu0 0.0
      %292 = vmatpush.msra.mxu0 0.0
      %293 = vmatpush.msra.mxu0 0.0
      %294 = vmatpush.msra.mxu0 0.0
      %295 = vmatpush.msra.mxu0 0.0
      %296 = vmatpush.msra.mxu0 0.0
      %297 = vmatpush.msra.mxu0 0.0
      %298 = vmatpush.msra.mxu0 0.0
      %299 = vmatpush.msra.mxu0 0.0
      %300 = vmatpush.msra.mxu0 0.0
      %301 = vmatpush.msra.mxu0 %v281
      %302 = vmatpush.msra.mxu0 %v280
      %303 = vmatpush.msra.mxu0 %v279
      %304 = vmatpush.msra.mxu0 %v278
      %305 = vmatpush.msra.mxu0 %v277
      %306 = vmatpush.msra.mxu0 %v276
      %307 = vmatmul.f32.gmra.mxu0 %v283
      %v308 = vpop.f32.mrf.mxu0
      %v309 = vadd.f32 0.0, %v308
      %310 = vmatmul.f32.gmra.mxu0 %v286
      %v311 = vpop.f32.mrf.mxu0
      %v312 = vadd.f32 0.0, %v311
      %313 = vmatmul.f32.gmra.mxu0 %v289
      %v314 = vpop.f32.mrf.mxu0
      %v315 = vadd.f32 0.0, %v314
      %316 = vdwg.mxu0
      %vm317 = vcmask 261120
      %v319 = vsel %vm317, %v309, 0
      %v322 = vsel %vm317, %v312, 0
      %v325 = vsel %vm317, %v315, 0
      %327 = vmatpush.msra.mxu0 0.0
      %328 = vmatpush.msra.mxu0 0.0
      %329 = vmatpush.msra.mxu0 0.0
      %330 = vmatpush.msra.mxu0 0.0
      %331 = vmatpush.msra.mxu0 0.0
      %332 = vmatpush.msra.mxu0 0.0
      %333 = vmatpush.msra.mxu0 0.0
      %334 = vmatpush.msra.mxu0 0.0
      %335 = vmatpush.msra.mxu0 0.0
      %336 = vmatpush.msra.mxu0 0.0
      %337 = vmatpush.msra.mxu0 0.0
      %338 = vmatpush.msra.mxu0 0.0
      %339 = vmatpush.msra.mxu0 %v165
      %340 = vmatpush.msra.mxu0 %v164
      %341 = vmatpush.msra.mxu0 %v163
      %342 = vmatpush.msra.mxu0 %v162
      %343 = vmatmul.f32.gmra.mxu0 %v319
      %v344 = vpop.f32.mrf.mxu0
      %v345 = vadd.f32 0.0, %v344
      %346 = vmatmul.f32.gmra.mxu0 %v322
      %v347 = vpop.f32.mrf.mxu0
      %v348 = vadd.f32 0.0, %v347
      %349 = vmatmul.f32.gmra.mxu0 %v325
      %v350 = vpop.f32.mrf.mxu0
      %v351 = vadd.f32 0.0, %v350
      %352 = vdwg.mxu0
      %v353 = vperm.slane %v166, 0
      %vm354 = vcmask 195584
      %v356 = vsel %vm354, %v157, 0
      %v359 = vsel %vm354, %v158, 0
      %v362 = vsel %vm354, %v159, 0
      %364 = vmatpush.msra.mxu0 0.0
      %365 = vmatpush.msra.mxu0 0.0
      %366 = vmatpush.msra.mxu0 0.0
      %367 = vmatpush.msra.mxu0 0.0
      %368 = vmatpush.msra.mxu0 0.0
      %369 = vmatpush.msra.mxu0 0.0
      %370 = vmatpush.msra.mxu0 0.0
      %371 = vmatpush.msra.mxu0 0.0
      %372 = vmatpush.msra.mxu0 0.0
      %373 = vmatpush.msra.mxu0 0.0
      %374 = vmatpush.msra.mxu0 0.0
      %375 = vmatpush.msra.mxu0 0.0
      %376 = vmatpush.msra.mxu0 0.0
      %377 = vmatpush.msra.mxu0 %v351
      %378 = vmatpush.msra.mxu0 %v348
      %379 = vmatpush.msra.mxu0 %v345
      %380 = vmatmul.f32.gmra.mxu0 %v356
      %v381 = vpop.f32.mrf.mxu0
      %v382 = vadd.f32 %v353, %v381
      %383 = vmatmul.f32.gmra.mxu0 %v359
      %v384 = vpop.f32.mrf.mxu0
      %v385 = vadd.f32 %v353, %v384
      %386 = vmatmul.f32.gmra.mxu0 %v362
      %v387 = vpop.f32.mrf.mxu0
      %v388 = vadd.f32 %v353, %v387
      %389 = vdwg.mxu0
      %v390 = vmax.f32 %v382, 0.0
      %v391 = vmax.f32 %v385, 0.0
      %v392 = vmax.f32 %v388, 0.0
      %v393 = vsel %vm317, %v390, 0.0
      %v394 = vrot.slane %v393, 4
      %v395 = vadd.f32 %v393, %v394
      %v396 = vrot.slane %v395, 2
      %v397 = vadd.f32 %v395, %v396
      %v398 = vrot.slane %v397, 1
      %v399 = vadd.f32 %v397, %v398
      %v400 = vsel %vm317, %v391, 0.0
      %v401 = vrot.slane %v400, 4
      %v402 = vadd.f32 %v400, %v401
      %v403 = vrot.slane %v402, 2
      %v404 = vadd.f32 %v402, %v403
      %v405 = vrot.slane %v404, 1
      %v406 = vadd.f32 %v404, %v405
      %v407 = vsel %vm317, %v392, 0.0
      %v408 = vrot.slane %v407, 4
      %v409 = vadd.f32 %v407, %v408
      %v410 = vrot.slane %v409, 2
      %v411 = vadd.f32 %v409, %v410
      %v412 = vrot.slane %v411, 1
      %v413 = vadd.f32 %v411, %v412
      %vm414 = vcmask 1040384
      %v415 = vsel %vm414, %v399, %v406
      %vm416 = vcmask 1041408
      %v417 = vsel %vm416, %v415, %v413
      %v418 = vsub.f32 %v399, %v406
      %v419 = vsub.f32 %v399, %v413
      %v420 = vsel %vm414, %v418, %v419
      %v421 = vadd.f32 %v420, 1e-06
      %v422 = vmul.f32 %v421, %v421
      %vm423 = vcmask 254976
      %v424 = vsel %vm423, %v422, 0.0
      %425 = vadd.xlane.f32.xlu0 %v424
      %v426 = vpop.xlane.xlu0 %425
      %v427 = vrsqrt.pop %v426
      %v428 = vmul.f32 %v427, %v426
      %v429 = vmul.f32 %v428, %v427
      %v430 = vmul.f32 0.5, %v429
      %v431 = vsub.f32 1.5, %v430
      %v432 = vmul.f32 %v427, %v431
      %v433 = vmul.f32 %v426, %v432
      %vm434 = vcmp.eq.f32.partialorder %v426, inf
      %v435 = vsel %vm434, %v426, %v433
      %vm436 = vcmp.eq.f32.partialorder %v426, 0.0
      %v437 = vand.u32 %v426, 2147483648
      %v438 = vsel %vm436, %v437, %v435
      %v439 = vsel %vm317, %v417, 0.0
      %vm440 = vcmask 7168
      %v441 = vsel %vm440, %v438, 0.0
      %v443 = vrot.slane %v441, 5
      %vm445 = vcmask 1042432
      %v446 = vsel %vm445, %v439, %v443
      %vm447 = vcmask 1044480
      %v448 = vsel %vm447, %v446, 0.0
      %449 = vst [vmem:[%s141] sm:$0xff] %v448
      %p450 = scmp.lt.s32.totalorder %s13, 1
      %s451 = scalar_select %p450, %s13, 1
      %s452 = smul.addr %s451, 8
      %s453 = scalar_lea.vmem %s2, %s452
      // Predicated region
      $region29: #{_tripletnet_impl.1} parent=27 // pred_check
        %p454 = pneg %p78
      $region30: #{_tripletnet_impl.1} parent=27 // pred_check_branch
        %456 = sbr.rel (%p454) target = $region32
      $region31: #{_tripletnet_impl.1} parent=27 // pred_region
        _
      $region32: #{_tripletnet_impl.1} parent=27 // pred_fallthru
        _
    $region28: #{_tripletnet_impl.1} parent=5 // pred_fallthru
      _
    %p457 = scmp.le.s32.totalorder 2, %s8
    // Predicated region
    $region33: #{_tripletnet_impl.1} parent=5 // pred_check
      %p458 = pneg %p457
    $region34: #{_tripletnet_impl.1} parent=5 // pred_check_branch
      %460 = sbr.rel (%p458) target = $region36
    $region35: #{_tripletnet_impl.1} parent=5 // pred_region
      %s461 = ssub.s32 %s8, 2
      // Predicated region
      $region37: #{_tripletnet_impl.1} parent=35 // pred_check
        %p462 = pneg %p84
      $region38: #{_tripletnet_impl.1} parent=35 // pred_check_branch
        %464 = sbr.rel (%p462) target = $region40
      $region39: #{_tripletnet_impl.1} parent=35 // pred_region
        %p465 = scmp.lt.s32.totalorder %s14, 1
        %s466 = scalar_select %p465, %s14, 1
        %s467 = smul.addr %s466, 8
        %s468 = scalar_lea.vmem %s2, %s467
      $region40: #{_tripletnet_impl.1} parent=35 // pred_fallthru
        _
    $region36: #{_tripletnet_impl.1} parent=5 // pred_fallthru
      _
  $region6: #{_tripletnet_impl.1} parent=0 // loop_footer
    %s12 = sadd.s32 1, %s8
  $region7: #{_tripletnet_impl.1} parent=0 // loop_footer_branch
    %7 = sbr.rel target = $region3
  $region8: #{_tripletnet_impl.1} parent=0 // loop_exit
    _

</llo_original>
